<compile_context>
chip_gen: v7x
topology: tpu7x:2x2x1
jax: 0.10.0
libtpu: 0.0.40
codegen_flags: <defaults>
</compile_context>

<pallas_src>
import functools

import jax
import jax.numpy as jnp
from jax import lax
from jax.experimental import pallas as pl
from jax.experimental.pallas import tpu as pltpu

# ----------------------------------------------------------------------------
# Synthetic category configuration (stand-in for the env-derived dict).
# Embedding dim rule from the module: min(50, num_categories // 2).
# ----------------------------------------------------------------------------
CAT_COLS = ["bus_id", "station_id", "time_period", "direction"]
CAT_SIZES = {"bus_id": 8, "station_id": 12, "time_period": 10, "direction": 2}
EMB_DIMS = {c: min(50, CAT_SIZES[c] // 2) for c in CAT_COLS}     # 4, 6, 5, 1
N_CAT = len(CAT_COLS)
TOTAL_EMB_DIM = sum(EMB_DIMS.values())                            # 16
TOTAL_ROWS = sum(CAT_SIZES.values())                              # 32

_offs, _acc = [], 0
for _c in CAT_COLS:
    _offs.append(_acc)
    _acc += CAT_SIZES[_c]
ROW_OFFSETS = tuple(_offs)                                        # (0, 8, 20, 30)

NUM_NUMERIC = 8
STATE_WIDTH = N_CAT + NUM_NUMERIC                                 # 12
HIDDEN = 128                # lane-dense hidden width
NUM_ACTIONS = 2
HEAD_PAD = 128              # lane-dense merged head: [mean | log_std | zeros]
LOG_STD_MIN = -20.0
LOG_STD_MAX = 2.0
INIT_W = 0.003


def _round_up(x, m):
    return ((x + m - 1) // m) * m


# ----------------------------------------------------------------------------
# Kernel: one batch block of raw state -> merged [blk, HEAD_PAD] head output
# ----------------------------------------------------------------------------
def _policy_kernel(state_ref,
                   w1_ref, b1_ref, w2_ref, b2_ref, w3_ref, b3_ref,
                   w4_ref, b4_ref, wh_ref, bh_ref,
                   out_ref,
                   *, row_offsets, total_rows, n_cat, num_actions,
                   log_std_min, log_std_max):
    blk = state_ref.shape[0]

    state = state_ref[...]                                  # [blk, 12] f32
    idx = state[:, :n_cat].astype(jnp.int32)                # torch .long()
    num = state[:, n_cat:].astype(jnp.bfloat16)             # [blk, 8]

    # Single multi-hot over the stacked-table rows (disjoint ranges so
    # OR == concat of one-hots). Built directly in bf16 (exact).
    iota = lax.broadcasted_iota(jnp.int32, (blk, total_rows), 1)
    hot = iota == (idx[:, 0:1] + row_offsets[0])
    for c in range(1, n_cat):
        hot = jnp.logical_or(hot, iota == (idx[:, c:c + 1] + row_offsets[c]))
    mh = hot.astype(jnp.bfloat16)                           # [blk, 32]

    # Layer 1: embedding lookup + numeric path folded into ONE matmul.
    lhs = jnp.concatenate([mh, num], axis=1)                # [blk, 40] bf16
    h = jnp.dot(lhs, w1_ref[...], preferred_element_type=jnp.float32)
    h = jnp.maximum(h + b1_ref[...], 0.0)

    h = jnp.maximum(jnp.dot(h.astype(jnp.bfloat16), w2_ref[...],
                            preferred_element_type=jnp.float32) + b2_ref[...], 0.0)
    h = jnp.maximum(jnp.dot(h.astype(jnp.bfloat16), w3_ref[...],
                            preferred_element_type=jnp.float32) + b3_ref[...], 0.0)
    h = jnp.maximum(jnp.dot(h.astype(jnp.bfloat16), w4_ref[...],
                            preferred_element_type=jnp.float32) + b4_ref[...], 0.0)

    # Merged mean|log_std head, lane-dense (zero-padded to 128 lanes).
    head = jnp.dot(h.astype(jnp.bfloat16), wh_ref[...],
                   preferred_element_type=jnp.float32) + bh_ref[...]
    col = lax.broadcasted_iota(jnp.int32, head.shape, 1)
    clamped = jnp.clip(head, log_std_min, log_std_max)
    out = jnp.where(col < num_actions, head, clamped)       # clamp log_std lanes only
    out_ref[...] = out.astype(out_ref.dtype)


# ----------------------------------------------------------------------------
# Parameter construction / folding
# ----------------------------------------------------------------------------
def make_params(key):
    params = {}
    tables = []
    for col in CAT_COLS:
        key, sub = jax.random.split(key)
        tables.append(jax.random.normal(sub, (CAT_SIZES[col], EMB_DIMS[col]),
                                        jnp.float32))
    params["tables"] = tables

    num_inputs = TOTAL_EMB_DIM + NUM_NUMERIC
    dims = [(num_inputs, HIDDEN), (HIDDEN, HIDDEN),
            (HIDDEN, HIDDEN), (HIDDEN, HIDDEN)]
    ws, bs = [], []
    for fi, fo in dims:
        key, k1, k2 = jax.random.split(key, 3)
        bound = fi ** -0.5
        ws.append(jax.random.uniform(k1, (fi, fo), jnp.float32, -bound, bound))
        bs.append(jax.random.uniform(k2, (fo,), jnp.float32, -bound, bound))
    params["w"], params["b"] = ws, bs

    key, k1, k2, k3, k4 = jax.random.split(key, 5)
    params["wm"] = jax.random.uniform(k1, (HIDDEN, NUM_ACTIONS), jnp.float32,
                                      -INIT_W, INIT_W)
    params["bm"] = jax.random.uniform(k2, (NUM_ACTIONS,), jnp.float32,
                                      -INIT_W, INIT_W)
    params["ws"] = jax.random.uniform(k3, (HIDDEN, NUM_ACTIONS), jnp.float32,
                                      -INIT_W, INIT_W)
    params["bs"] = jax.random.uniform(k4, (NUM_ACTIONS,), jnp.float32,
                                      -INIT_W, INIT_W)
    return params


def _prepare_kernel_weights(params):
    """Fold embeddings into linear1, stack emb/num halves, merge heads, cast bf16."""
    # Block-diagonal stacked embedding table.
    stacked = jnp.zeros((TOTAL_ROWS, TOTAL_EMB_DIM), jnp.float32)
    r, c = 0, 0
    for t in params["tables"]:
        stacked = stacked.at[r:r + t.shape[0], c:c + t.shape[1]].set(t)
        r += t.shape[0]
        c += t.shape[1]
    w1 = params["w"][0]
    wemb = stacked @ w1[:TOTAL_EMB_DIM, :]                  # [TOTAL_ROWS, H]
    w1_full = jnp.concatenate([wemb, w1[TOTAL_EMB_DIM:, :]], axis=0)  # [40, H]

    # Merged, zero-padded, lane-dense head: columns [0:A]=mean, [A:2A]=log_std.
    wh = jnp.zeros((HIDDEN, HEAD_PAD), jnp.float32)
    wh = wh.at[:, :NUM_ACTIONS].set(params["wm"])
    wh = wh.at[:, NUM_ACTIONS:2 * NUM_ACTIONS].set(params["ws"])
    bh = jnp.zeros((1, HEAD_PAD), jnp.float32)
    bh = bh.at[0, :NUM_ACTIONS].set(params["bm"])
    bh = bh.at[0, NUM_ACTIONS:2 * NUM_ACTIONS].set(params["bs"])

    bf16 = jnp.bfloat16
    return dict(
        w1=w1_full.astype(bf16),
        b1=params["b"][0].reshape(1, -1),
        w2=params["w"][1].astype(bf16), b2=params["b"][1].reshape(1, -1),
        w3=params["w"][2].astype(bf16), b3=params["b"][2].reshape(1, -1),
        w4=params["w"][3].astype(bf16), b4=params["b"][3].reshape(1, -1),
        wh=wh.astype(bf16), bh=bh,
    )


# ----------------------------------------------------------------------------
# Wrapper: PolicyNetwork.forward
# ----------------------------------------------------------------------------
def policy_forward(state, params, *, block_b=None):
    """state: [B, N_CAT + NUM_NUMERIC] float32 -> (mean, log_std) [B, A]."""
    B = state.shape[0]
    kw = _prepare_kernel_weights(params)
    H, A = HIDDEN, NUM_ACTIONS

    # Batch block: big enough to amortize per-step overhead (working set is
    # only ~0.2 MiB of weights + [blk, H] activations), but keep grid >= 2
    # whenever the batch allows so v7x's 2 TensorCores both get work.
    if block_b is None:
        block_b = min(4096, max(8, _round_up(pl.cdiv(B, 2), 8)))
    Bp = _round_up(max(B, block_b), block_b)
    if Bp != B:
        # Only materializes a padded copy when block_b doesn't divide B.
        state = jnp.pad(state, ((0, Bp - B), (0, 0)))       # cat index 0 is valid
    grid = (Bp // block_b,)

    kernel = functools.partial(
        _policy_kernel,
        row_offsets=ROW_OFFSETS, total_rows=TOTAL_ROWS, n_cat=N_CAT,
        num_actions=A, log_std_min=LOG_STD_MIN, log_std_max=LOG_STD_MAX)

    def const_spec(rows, cols):
        return pl.BlockSpec((rows, cols), lambda i: (0, 0))   # VMEM-resident

    in_specs = [
        pl.BlockSpec((block_b, STATE_WIDTH), lambda i: (i, 0)),   # raw state
        const_spec(TOTAL_ROWS + NUM_NUMERIC, H),                  # fused layer-1 W
        const_spec(1, H),
        const_spec(H, H), const_spec(1, H),
        const_spec(H, H), const_spec(1, H),
        const_spec(H, H), const_spec(1, H),
        const_spec(H, HEAD_PAD), const_spec(1, HEAD_PAD),         # merged head
    ]
    out_specs = pl.BlockSpec((block_b, HEAD_PAD), lambda i: (i, 0))
    out_shape = jax.ShapeDtypeStruct((Bp, HEAD_PAD), jnp.float32)

    weight_args = (kw["w1"], kw["b1"], kw["w2"], kw["b2"], kw["w3"], kw["b3"],
                   kw["w4"], kw["b4"], kw["wh"], kw["bh"])
    weight_bytes = sum(int(a.size) * a.dtype.itemsize for a in weight_args)
    flops = int(Bp) * (2 * (TOTAL_ROWS + NUM_NUMERIC) * H
                       + 3 * 2 * H * H + 2 * H * HEAD_PAD)
    bytes_accessed = int(Bp) * STATE_WIDTH * 4 + int(Bp) * HEAD_PAD * 4 + weight_bytes

    out = pl.pallas_call(
        kernel,
        grid=grid,
        in_specs=in_specs,
        out_specs=out_specs,
        out_shape=out_shape,
        compiler_params=pltpu.CompilerParams(
            dimension_semantics=("parallel",)),      # shard batch over v7x's 2 TCs
        cost_estimate=pl.CostEstimate(
            flops=flops, transcendentals=0, bytes_accessed=bytes_accessed),
    )(state, *weight_args)

    mean = out[:B, :A]
    log_std = out[:B, A:2 * A]
    return mean, log_std


# ----------------------------------------------------------------------------
# Pure-JAX reference (mirrors the torch module, unfused, f32)
# ----------------------------------------------------------------------------
def reference_forward(state, params):
    cat_idx = state[:, :N_CAT].astype(jnp.int32)
    num = state[:, N_CAT:]
    embs = [params["tables"][c][cat_idx[:, c]] for c in range(N_CAT)]
    x = jnp.concatenate(embs + [num], axis=1)
    for w, b in zip(params["w"], params["b"]):
        x = jax.nn.relu(x @ w + b)
    mean = x @ params["wm"] + params["bm"]
    log_std = jnp.clip(x @ params["ws"] + params["bs"], LOG_STD_MIN, LOG_STD_MAX)
    return mean, log_std


if __name__ == "__main__":
    # TODO(synk): evaluate()/get_action() stochastic sampling (Normal z-draw,
    # tanh squash, log-prob) is left to the host/JAX level; kernel = forward().
    root = jax.random.PRNGKey(0)
    pkey, dkey = jax.random.split(root)
    params = make_params(pkey)

    B = 64
    cols = []
    for col in CAT_COLS:
        dkey, sub = jax.random.split(dkey)
        cols.append(jax.random.randint(sub, (B, 1), 0, CAT_SIZES[col],
                                       jnp.int32).astype(jnp.float32))
    dkey, sub = jax.random.split(dkey)
    num_feats = jax.random.normal(sub, (B, NUM_NUMERIC), jnp.float32)
    state = jnp.concatenate(cols + [num_feats], axis=1)   # [B, 12] float32

    mean, log_std = policy_forward(state, params)          # default: grid of 2
    mean = jax.block_until_ready(mean)
    log_std = jax.block_until_ready(log_std)

    ref_mean, ref_log_std = reference_forward(state, params)
    assert mean.shape == (B, NUM_ACTIONS), mean.shape
    assert log_std.shape == (B, NUM_ACTIONS), log_std.shape
    # bf16 matmul chain vs f32 reference -> loosened tolerance.
    assert jnp.allclose(mean, ref_mean, atol=2e-2, rtol=2e-2), \
        float(jnp.max(jnp.abs(mean - ref_mean)))
    assert jnp.allclose(log_std, ref_log_std, atol=2e-2, rtol=2e-2), \
        float(jnp.max(jnp.abs(log_std - ref_log_std)))

    print("KERNEL_OK")
</pallas_src>

<mosaic_0001>
module attributes {stable_mosaic.version = 11 : i64} {
  func.func @_policy_kernel(%arg0: i32, %arg1: memref<32x12xf32, #tpu.memory_space<vmem>>, %arg2: memref<40x128xbf16, #tpu.memory_space<vmem>>, %arg3: memref<1x128xf32, #tpu.memory_space<vmem>>, %arg4: memref<128x128xbf16, #tpu.memory_space<vmem>>, %arg5: memref<1x128xf32, #tpu.memory_space<vmem>>, %arg6: memref<128x128xbf16, #tpu.memory_space<vmem>>, %arg7: memref<1x128xf32, #tpu.memory_space<vmem>>, %arg8: memref<128x128xbf16, #tpu.memory_space<vmem>>, %arg9: memref<1x128xf32, #tpu.memory_space<vmem>>, %arg10: memref<128x128xbf16, #tpu.memory_space<vmem>>, %arg11: memref<1x128xf32, #tpu.memory_space<vmem>>, %arg12: memref<32x128xf32, #tpu.memory_space<vmem>>) attributes {dimension_semantics = [#tpu.dimension_semantics<parallel>], iteration_bounds = array<i64: 2>, scalar_prefetch = 0 : i64, scratch_operands = 0 : i64, tpu.core_type = #tpu.core_type<tc>, window_params = [{transform_indices = @transform_0, window_bounds = array<i64: 32, 12>}, {pipeline_mode = #tpu.pipeline_mode<synchronous>, transform_indices = @transform_1, window_bounds = array<i64: 40, 128>}, {pipeline_mode = #tpu.pipeline_mode<synchronous>, transform_indices = @transform_2, window_bounds = array<i64: 1, 128>}, {pipeline_mode = #tpu.pipeline_mode<synchronous>, transform_indices = @transform_3, window_bounds = array<i64: 128, 128>}, {pipeline_mode = #tpu.pipeline_mode<synchronous>, transform_indices = @transform_4, window_bounds = array<i64: 1, 128>}, {pipeline_mode = #tpu.pipeline_mode<synchronous>, transform_indices = @transform_5, window_bounds = array<i64: 128, 128>}, {pipeline_mode = #tpu.pipeline_mode<synchronous>, transform_indices = @transform_6, window_bounds = array<i64: 1, 128>}, {pipeline_mode = #tpu.pipeline_mode<synchronous>, transform_indices = @transform_7, window_bounds = array<i64: 128, 128>}, {pipeline_mode = #tpu.pipeline_mode<synchronous>, transform_indices = @transform_8, window_bounds = array<i64: 1, 128>}, {pipeline_mode = #tpu.pipeline_mode<synchronous>, transform_indices = @transform_9, window_bounds = array<i64: 128, 128>}, {pipeline_mode = #tpu.pipeline_mode<synchronous>, transform_indices = @transform_10, window_bounds = array<i64: 1, 128>}, {transform_indices = @transform_11, window_bounds = array<i64: 32, 128>}]} {
    %c0 = arith.constant 0 : index
    %c0_0 = arith.constant 0 : index
    %0 = vector.load %arg1[%c0, %c0_0] : memref<32x12xf32, #tpu.memory_space<vmem>>, vector<32x12xf32>
    %1 = vector.extract_strided_slice %0 {offsets = [0, 0], sizes = [32, 4], strides = [1, 1]} : vector<32x12xf32> to vector<32x4xf32>
    %2 = arith.fptosi %1 : vector<32x4xf32> to vector<32x4xi32>
    %3 = vector.extract_strided_slice %0 {offsets = [0, 4], sizes = [32, 8], strides = [1, 1]} : vector<32x12xf32> to vector<32x8xf32>
    %4 = arith.truncf %3 : vector<32x8xf32> to vector<32x8xbf16>
    %5 = tpu.iota {dimensions = array<i32: 1>} : vector<32x32xi32>
    %6 = vector.extract_strided_slice %2 {offsets = [0, 0], sizes = [32, 1], strides = [1, 1]} : vector<32x4xi32> to vector<32x1xi32>
    %c0_i32 = arith.constant 0 : i32
    %7 = vector.broadcast %c0_i32 : i32 to vector<32x1xi32>
    %8 = arith.addi %6, %7 : vector<32x1xi32>
    %9 = vector.broadcast %8 : vector<32x1xi32> to vector<32x32xi32>
    %10 = arith.cmpi eq, %5, %9 : vector<32x32xi32>
    %11 = vector.extract_strided_slice %2 {offsets = [0, 1], sizes = [32, 1], strides = [1, 1]} : vector<32x4xi32> to vector<32x1xi32>
    %c8_i32 = arith.constant 8 : i32
    %12 = vector.broadcast %c8_i32 : i32 to vector<32x1xi32>
    %13 = arith.addi %11, %12 : vector<32x1xi32>
    %14 = vector.broadcast %13 : vector<32x1xi32> to vector<32x32xi32>
    %15 = arith.cmpi eq, %5, %14 : vector<32x32xi32>
    %16 = arith.ori %10, %15 : vector<32x32xi1>
    %17 = vector.extract_strided_slice %2 {offsets = [0, 2], sizes = [32, 1], strides = [1, 1]} : vector<32x4xi32> to vector<32x1xi32>
    %c20_i32 = arith.constant 20 : i32
    %18 = vector.broadcast %c20_i32 : i32 to vector<32x1xi32>
    %19 = arith.addi %17, %18 : vector<32x1xi32>
    %20 = vector.broadcast %19 : vector<32x1xi32> to vector<32x32xi32>
    %21 = arith.cmpi eq, %5, %20 : vector<32x32xi32>
    %22 = arith.ori %16, %21 : vector<32x32xi1>
    %23 = vector.extract_strided_slice %2 {offsets = [0, 3], sizes = [32, 1], strides = [1, 1]} : vector<32x4xi32> to vector<32x1xi32>
    %c30_i32 = arith.constant 30 : i32
    %24 = vector.broadcast %c30_i32 : i32 to vector<32x1xi32>
    %25 = arith.addi %23, %24 : vector<32x1xi32>
    %26 = vector.broadcast %25 : vector<32x1xi32> to vector<32x32xi32>
    %27 = arith.cmpi eq, %5, %26 : vector<32x32xi32>
    %28 = arith.ori %22, %27 : vector<32x32xi1>
    %29 = arith.extui %28 : vector<32x32xi1> to vector<32x32xi32>
    %30 = arith.sitofp %29 : vector<32x32xi32> to vector<32x32xf32>
    %31 = arith.truncf %30 : vector<32x32xf32> to vector<32x32xbf16>
    %32 = tpu.concatenate %31, %4 in 1 : vector<32x32xbf16>, vector<32x8xbf16> -> vector<32x40xbf16>
    %c0_1 = arith.constant 0 : index
    %c0_2 = arith.constant 0 : index
    %33 = vector.load %arg2[%c0_1, %c0_2] : memref<40x128xbf16, #tpu.memory_space<vmem>>, vector<40x128xbf16>
    %cst = arith.constant dense<0.000000e+00> : vector<32x128xf32>
    %34 = tpu.matmul %32, %33, %cst {dimension_numbers = #tpu.dot_dimension_numbers<[1], [0], [0], [1], [0, 0, 1, 1], [], []>} : vector<32x40xbf16>, vector<40x128xbf16>, vector<32x128xf32> -> vector<32x128xf32>
    %c0_3 = arith.constant 0 : index
    %c0_4 = arith.constant 0 : index
    %35 = vector.load %arg3[%c0_3, %c0_4] : memref<1x128xf32, #tpu.memory_space<vmem>>, vector<1x128xf32>
    %36 = vector.broadcast %35 : vector<1x128xf32> to vector<32x128xf32>
    %37 = arith.addf %34, %36 : vector<32x128xf32>
    %cst_5 = arith.constant 0.000000e+00 : f32
    %38 = vector.broadcast %cst_5 : f32 to vector<32x128xf32>
    %39 = arith.maximumf %37, %38 : vector<32x128xf32>
    %40 = arith.truncf %39 : vector<32x128xf32> to vector<32x128xbf16>
    %c0_6 = arith.constant 0 : index
    %c0_7 = arith.constant 0 : index
    %41 = vector.load %arg4[%c0_6, %c0_7] : memref<128x128xbf16, #tpu.memory_space<vmem>>, vector<128x128xbf16>
    %cst_8 = arith.constant dense<0.000000e+00> : vector<32x128xf32>
    %42 = tpu.matmul %40, %41, %cst_8 {dimension_numbers = #tpu.dot_dimension_numbers<[1], [0], [0], [1], [0, 0, 1, 1], [], []>} : vector<32x128xbf16>, vector<128x128xbf16>, vector<32x128xf32> -> vector<32x128xf32>
    %c0_9 = arith.constant 0 : index
    %c0_10 = arith.constant 0 : index
    %43 = vector.load %arg5[%c0_9, %c0_10] : memref<1x128xf32, #tpu.memory_space<vmem>>, vector<1x128xf32>
    %44 = vector.broadcast %43 : vector<1x128xf32> to vector<32x128xf32>
    %45 = arith.addf %42, %44 : vector<32x128xf32>
    %cst_11 = arith.constant 0.000000e+00 : f32
    %46 = vector.broadcast %cst_11 : f32 to vector<32x128xf32>
    %47 = arith.maximumf %45, %46 : vector<32x128xf32>
    %48 = arith.truncf %47 : vector<32x128xf32> to vector<32x128xbf16>
    %c0_12 = arith.constant 0 : index
    %c0_13 = arith.constant 0 : index
    %49 = vector.load %arg6[%c0_12, %c0_13] : memref<128x128xbf16, #tpu.memory_space<vmem>>, vector<128x128xbf16>
    %cst_14 = arith.constant dense<0.000000e+00> : vector<32x128xf32>
    %50 = tpu.matmul %48, %49, %cst_14 {dimension_numbers = #tpu.dot_dimension_numbers<[1], [0], [0], [1], [0, 0, 1, 1], [], []>} : vector<32x128xbf16>, vector<128x128xbf16>, vector<32x128xf32> -> vector<32x128xf32>
    %c0_15 = arith.constant 0 : index
    %c0_16 = arith.constant 0 : index
    %51 = vector.load %arg7[%c0_15, %c0_16] : memref<1x128xf32, #tpu.memory_space<vmem>>, vector<1x128xf32>
    %52 = vector.broadcast %51 : vector<1x128xf32> to vector<32x128xf32>
    %53 = arith.addf %50, %52 : vector<32x128xf32>
    %cst_17 = arith.constant 0.000000e+00 : f32
    %54 = vector.broadcast %cst_17 : f32 to vector<32x128xf32>
    %55 = arith.maximumf %53, %54 : vector<32x128xf32>
    %56 = arith.truncf %55 : vector<32x128xf32> to vector<32x128xbf16>
    %c0_18 = arith.constant 0 : index
    %c0_19 = arith.constant 0 : index
    %57 = vector.load %arg8[%c0_18, %c0_19] : memref<128x128xbf16, #tpu.memory_space<vmem>>, vector<128x128xbf16>
    %cst_20 = arith.constant dense<0.000000e+00> : vector<32x128xf32>
    %58 = tpu.matmul %56, %57, %cst_20 {dimension_numbers = #tpu.dot_dimension_numbers<[1], [0], [0], [1], [0, 0, 1, 1], [], []>} : vector<32x128xbf16>, vector<128x128xbf16>, vector<32x128xf32> -> vector<32x128xf32>
    %c0_21 = arith.constant 0 : index
    %c0_22 = arith.constant 0 : index
    %59 = vector.load %arg9[%c0_21, %c0_22] : memref<1x128xf32, #tpu.memory_space<vmem>>, vector<1x128xf32>
    %60 = vector.broadcast %59 : vector<1x128xf32> to vector<32x128xf32>
    %61 = arith.addf %58, %60 : vector<32x128xf32>
    %cst_23 = arith.constant 0.000000e+00 : f32
    %62 = vector.broadcast %cst_23 : f32 to vector<32x128xf32>
    %63 = arith.maximumf %61, %62 : vector<32x128xf32>
    %64 = arith.truncf %63 : vector<32x128xf32> to vector<32x128xbf16>
    %c0_24 = arith.constant 0 : index
    %c0_25 = arith.constant 0 : index
    %65 = vector.load %arg10[%c0_24, %c0_25] : memref<128x128xbf16, #tpu.memory_space<vmem>>, vector<128x128xbf16>
    %cst_26 = arith.constant dense<0.000000e+00> : vector<32x128xf32>
    %66 = tpu.matmul %64, %65, %cst_26 {dimension_numbers = #tpu.dot_dimension_numbers<[1], [0], [0], [1], [0, 0, 1, 1], [], []>} : vector<32x128xbf16>, vector<128x128xbf16>, vector<32x128xf32> -> vector<32x128xf32>
    %c0_27 = arith.constant 0 : index
    %c0_28 = arith.constant 0 : index
    %67 = vector.load %arg11[%c0_27, %c0_28] : memref<1x128xf32, #tpu.memory_space<vmem>>, vector<1x128xf32>
    %68 = vector.broadcast %67 : vector<1x128xf32> to vector<32x128xf32>
    %69 = arith.addf %66, %68 : vector<32x128xf32>
    %70 = tpu.iota {dimensions = array<i32: 1>} : vector<32x128xi32>
    %cst_29 = arith.constant -2.000000e+01 : f32
    %cst_30 = arith.constant 2.000000e+00 : f32
    %71 = vector.broadcast %cst_29 : f32 to vector<32x128xf32>
    %72 = arith.maximumf %71, %69 : vector<32x128xf32>
    %73 = vector.broadcast %cst_30 : f32 to vector<32x128xf32>
    %74 = arith.minimumf %73, %72 : vector<32x128xf32>
    %c2_i32 = arith.constant 2 : i32
    %75 = vector.broadcast %c2_i32 : i32 to vector<32x128xi32>
    %76 = arith.cmpi slt, %70, %75 : vector<32x128xi32>
    %77 = arith.select %76, %69, %74 : vector<32x128xi1>, vector<32x128xf32>
    %c0_31 = arith.constant 0 : index
    %c0_32 = arith.constant 0 : index
    %78 = vector.load %arg12[%c0_31, %c0_32] : memref<32x128xf32, #tpu.memory_space<vmem>>, vector<32x128xf32>
    tpu.vector_store %arg12[%c0_31, %c0_32], %77 {strides = array<i32>} : memref<32x128xf32, #tpu.memory_space<vmem>>, vector<32x128xf32>,
    return
  }
  func.func @transform_0(%arg0: i32) -> (i32, i32) {
    %c0_i32 = arith.constant 0 : i32
    %c0_i32_0 = arith.constant 0 : i32
    return %arg0, %c0_i32 : i32, i32
  }
  func.func @transform_1(%arg0: i32) -> (i32, i32) {
    %c0_i32 = arith.constant 0 : i32
    %c0_i32_0 = arith.constant 0 : i32
    %c0_i32_1 = arith.constant 0 : i32
    return %c0_i32, %c0_i32_0 : i32, i32
  }
  func.func @transform_2(%arg0: i32) -> (i32, i32) {
    %c0_i32 = arith.constant 0 : i32
    %c0_i32_0 = arith.constant 0 : i32
    %c0_i32_1 = arith.constant 0 : i32
    return %c0_i32, %c0_i32_0 : i32, i32
  }
  func.func @transform_3(%arg0: i32) -> (i32, i32) {
    %c0_i32 = arith.constant 0 : i32
    %c0_i32_0 = arith.constant 0 : i32
    %c0_i32_1 = arith.constant 0 : i32
    return %c0_i32, %c0_i32_0 : i32, i32
  }
  func.func @transform_4(%arg0: i32) -> (i32, i32) {
    %c0_i32 = arith.constant 0 : i32
    %c0_i32_0 = arith.constant 0 : i32
    %c0_i32_1 = arith.constant 0 : i32
    return %c0_i32, %c0_i32_0 : i32, i32
  }
  func.func @transform_5(%arg0: i32) -> (i32, i32) {
    %c0_i32 = arith.constant 0 : i32
    %c0_i32_0 = arith.constant 0 : i32
    %c0_i32_1 = arith.constant 0 : i32
    return %c0_i32, %c0_i32_0 : i32, i32
  }
  func.func @transform_6(%arg0: i32) -> (i32, i32) {
    %c0_i32 = arith.constant 0 : i32
    %c0_i32_0 = arith.constant 0 : i32
    %c0_i32_1 = arith.constant 0 : i32
    return %c0_i32, %c0_i32_0 : i32, i32
  }
  func.func @transform_7(%arg0: i32) -> (i32, i32) {
    %c0_i32 = arith.constant 0 : i32
    %c0_i32_0 = arith.constant 0 : i32
    %c0_i32_1 = arith.constant 0 : i32
    return %c0_i32, %c0_i32_0 : i32, i32
  }
  func.func @transform_8(%arg0: i32) -> (i32, i32) {
    %c0_i32 = arith.constant 0 : i32
    %c0_i32_0 = arith.constant 0 : i32
    %c0_i32_1 = arith.constant 0 : i32
    return %c0_i32, %c0_i32_0 : i32, i32
  }
  func.func @transform_9(%arg0: i32) -> (i32, i32) {
    %c0_i32 = arith.constant 0 : i32
    %c0_i32_0 = arith.constant 0 : i32
    %c0_i32_1 = arith.constant 0 : i32
    return %c0_i32, %c0_i32_0 : i32, i32
  }
  func.func @transform_10(%arg0: i32) -> (i32, i32) {
    %c0_i32 = arith.constant 0 : i32
    %c0_i32_0 = arith.constant 0 : i32
    %c0_i32_1 = arith.constant 0 : i32
    return %c0_i32, %c0_i32_0 : i32, i32
  }
  func.func @transform_11(%arg0: i32) -> (i32, i32) {
    %c0_i32 = arith.constant 0 : i32
    %c0_i32_0 = arith.constant 0 : i32
    return %arg0, %c0_i32 : i32, i32
  }
}

</mosaic_0001>

<llo_original>
// kernel: tpu_custom_call.1
$region0: #{tpu_custom_call.1}
  #allocation0 [shape = 'u32[]', space=smem, size = 0x4, offset = 0x4, fixed_abs, tag = 'smem constant byte address 0x4 - core index']
  #allocation1 [shape = 'u32[144,128]{1,0:T(1,128)}', space=vmem, size = 0x12000, scoped, tag = 'internal scratch']
  %s0 = inlined_call_operand.vmem [shape: f32[64,12], index: 0, kind: input, shape index: {}]
  %s1 = inlined_call_operand.vmem [shape: bf16[40,128], index: 1, kind: input, shape index: {}]
  %s2 = inlined_call_operand.vmem [shape: f32[1,128], index: 2, kind: input, shape index: {}]
  %s3 = inlined_call_operand.vmem [shape: bf16[128,128], index: 3, kind: input, shape index: {}]
  %s4 = inlined_call_operand.vmem [shape: f32[1,128], index: 4, kind: input, shape index: {}]
  %s5 = inlined_call_operand.hbm [shape: bf16[128,128], index: 5, kind: input, shape index: {}]
  %s6 = inlined_call_operand.vmem [shape: f32[1,128], index: 6, kind: input, shape index: {}]
  %s7 = inlined_call_operand.hbm [shape: bf16[128,128], index: 7, kind: input, shape index: {}]
  %s8 = inlined_call_operand.vmem [shape: f32[1,128], index: 8, kind: input, shape index: {}]
  %s9 = inlined_call_operand.hbm [shape: bf16[128,128], index: 9, kind: input, shape index: {}]
  %s10 = inlined_call_operand.vmem [shape: f32[1,128], index: 10, kind: input, shape index: {}]
  %s11 = inlined_call_operand.hbm [shape: f32[64,128], index: 11, kind: output, shape index: {}]
  %s12 = sld [smem:[#allocation0]]
  $region89: #{tpu_custom_call.1} parent=0
    _
  %s14 = ssub.s32 1, %s12
  %s15 = scalar_select 0, %s14, %s12
  $region1: #{tpu_custom_call.1} parent=0
    #allocation2 [shape = 'u8[32768]{0}', space=vmem, size = 0x8000, scoped, tag = 'input window, operand 5, single buffered']
    #allocation3 [shape = 's32[2]{0}', space=sflag, size = 0x8, scoped, tag = 'scoped memory for tpu_custom_call.1']
    #allocation4 [shape = 's32[2]{0}', space=sflag, size = 0x8, scoped, tag = 'scoped memory for tpu_custom_call.1']
    #allocation5 [shape = 'u8[32768]{0}', space=vmem, size = 0x8000, scoped, tag = 'input window, operand 7, single buffered']
    #allocation6 [shape = 's32[1]{0}', space=sflag, size = 0x4, scoped, tag = 'scoped memory for tpu_custom_call.1']
    #allocation7 [shape = 'u8[32768]{0}', space=vmem, size = 0x8000, scoped, tag = 'input window, operand 9, single buffered']
    #allocation8 [shape = 'u8[32768]{0}', space=vmem, size = 0x8000, scoped, tag = 'output window, operand 0']
    %16 = vsyncpa [#allocation3], 0
    %17 = vsyncpa [#allocation6], 0
    %18 = vsyncpa [#allocation4], 0
    %s19 = scalar_lea.sflag [#allocation4], 1
    %20 = vsyncpa %s19, 0
    loop: start=0, step=1, limit=4
    $region2: #{tpu_custom_call.1} parent=1 // loop_pre_header
      _
    $region3: #{tpu_custom_call.1} parent=1 // loop_header
      %s22 = sphi 0, %s26
      %p23 = scmp.ge.s32.totalorder %s22, 4
      %s32 = sphi 0, %s34
      %s35 = sphi 0, %s32
      %s36 = sphi 0, %s35
      %s52 = sphi 0, %s36
      %s56 = sphi 0, %s56
      %s58 = sphi 0, %s56
      %s59 = sphi 0, %s58
      %s73 = sphi 0, %s59
      %s77 = sphi 0, %s77
      %s79 = sphi 0, %s77
      %s80 = sphi 0, %s79
      %s94 = sphi 0, %s80
      %s98 = sphi 0, %s98
      %s100 = sphi 0, %s98
      %s101 = sphi 0, %s100
      %s115 = sphi 0, %s101
      %s119 = sphi 0, %s119
      %s121 = sphi 0, %s119
      %s122 = sphi 0, %s121
      %s136 = sphi 0, %s122
      %s140 = sphi 0, %s140
      %s142 = sphi 0, %s140
      %s143 = sphi 0, %s142
      %s157 = sphi 0, %s143
      %s161 = sphi 0, %s161
      %s163 = sphi 0, %s161
      %s164 = sphi 0, %s163
      %s178 = sphi 0, %s164
      %s182 = sphi 0, %s182
      %s184 = sphi 0, %s182
      %s185 = sphi 0, %s184
      %s199 = sphi 0, %s185
      %s203 = sphi 0, %s203
      %s205 = sphi 0, %s203
      %s206 = sphi 0, %s205
      %s220 = sphi 0, %s206
      %s224 = sphi 0, %s224
      %s226 = sphi 0, %s224
      %s227 = sphi 0, %s226
      %s241 = sphi 0, %s227
      %s245 = sphi 0, %s245
      %s247 = sphi 0, %s245
      %s248 = sphi 0, %s247
      %s262 = sphi 0, %s248
      %s268 = sphi 0, %s270
      %s271 = sphi 0, %s268
      %s272 = sphi 0, %s271
      %s288 = sphi 0, %s272
    $region4: #{tpu_custom_call.1} parent=1 // loop_header_branch
      %25 = sbr.rel (%p23) target = $region8
    $region5: #{tpu_custom_call.1} parent=1 // loop_body
      %s27 = ssub.s32 %s22, 1
      %s28 = ssub.s32 %s22, 2
      %s29 = sadd.s32 %s22, 1
      %s30 = ssub.s32 %s22, %s29
      %p31 = scmp.eq.s32.totalorder %s30, 0
      %s33 = sadd.s32 %s32, 1
      %s34 = scalar_select %p31, %s32, %s33
      %p37 = pneg %p31
      %p38 = scmp.eq.s32.totalorder %s22, 1
      %p39 = por %p37, %p38
      %p40 = scmp.ne.s32.totalorder %s32, %s35
      %p41 = scmp.eq.s32.totalorder %s22, 0
      %p42 = por %p40, %p41
      %p43 = scmp.ne.s32.totalorder %s32, %s35
      %p44 = scmp.eq.s32.totalorder %s27, 1
      %p45 = por %p43, %p44
      %p46 = scmp.ne.s32.totalorder %s35, %s36
      %p47 = scmp.eq.s32.totalorder %s27, 0
      %p48 = por %p46, %p47
      %p49 = scmp.ne.s32.totalorder %s35, %s36
      %p50 = scmp.eq.s32.totalorder %s28, 1
      %p51 = por %p49, %p50
      %p53 = scmp.ne.s32.totalorder %s36, %s52
      %p54 = scmp.eq.s32.totalorder %s28, 0
      %p55 = por %p53, %p54
      %s57 = sadd.s32 %s56, 1
      %p60 = scmp.eq.s32.totalorder %s22, 1
      %p61 = scmp.ne.s32.totalorder %s56, %s58
      %p62 = scmp.eq.s32.totalorder %s22, 0
      %p63 = por %p61, %p62
      %p64 = scmp.ne.s32.totalorder %s56, %s58
      %p65 = scmp.eq.s32.totalorder %s27, 1
      %p66 = por %p64, %p65
      %p67 = scmp.ne.s32.totalorder %s58, %s59
      %p68 = scmp.eq.s32.totalorder %s27, 0
      %p69 = por %p67, %p68
      %p70 = scmp.ne.s32.totalorder %s58, %s59
      %p71 = scmp.eq.s32.totalorder %s28, 1
      %p72 = por %p70, %p71
      %p74 = scmp.ne.s32.totalorder %s59, %s73
      %p75 = scmp.eq.s32.totalorder %s28, 0
      %p76 = por %p74, %p75
      %s78 = sadd.s32 %s77, 1
      %p81 = scmp.eq.s32.totalorder %s22, 1
      %p82 = scmp.ne.s32.totalorder %s77, %s79
      %p83 = scmp.eq.s32.totalorder %s22, 0
      %p84 = por %p82, %p83
      %p85 = scmp.ne.s32.totalorder %s77, %s79
      %p86 = scmp.eq.s32.totalorder %s27, 1
      %p87 = por %p85, %p86
      %p88 = scmp.ne.s32.totalorder %s79, %s80
      %p89 = scmp.eq.s32.totalorder %s27, 0
      %p90 = por %p88, %p89
      %p91 = scmp.ne.s32.totalorder %s79, %s80
      %p92 = scmp.eq.s32.totalorder %s28, 1
      %p93 = por %p91, %p92
      %p95 = scmp.ne.s32.totalorder %s80, %s94
      %p96 = scmp.eq.s32.totalorder %s28, 0
      %p97 = por %p95, %p96
      %s99 = sadd.s32 %s98, 1
      %p102 = scmp.eq.s32.totalorder %s22, 1
      %p103 = scmp.ne.s32.totalorder %s98, %s100
      %p104 = scmp.eq.s32.totalorder %s22, 0
      %p105 = por %p103, %p104
      %p106 = scmp.ne.s32.totalorder %s98, %s100
      %p107 = scmp.eq.s32.totalorder %s27, 1
      %p108 = por %p106, %p107
      %p109 = scmp.ne.s32.totalorder %s100, %s101
      %p110 = scmp.eq.s32.totalorder %s27, 0
      %p111 = por %p109, %p110
      %p112 = scmp.ne.s32.totalorder %s100, %s101
      %p113 = scmp.eq.s32.totalorder %s28, 1
      %p114 = por %p112, %p113
      %p116 = scmp.ne.s32.totalorder %s101, %s115
      %p117 = scmp.eq.s32.totalorder %s28, 0
      %p118 = por %p116, %p117
      %s120 = sadd.s32 %s119, 1
      %p123 = scmp.eq.s32.totalorder %s22, 1
      %p124 = scmp.ne.s32.totalorder %s119, %s121
      %p125 = scmp.eq.s32.totalorder %s22, 0
      %p126 = por %p124, %p125
      %p127 = scmp.ne.s32.totalorder %s119, %s121
      %p128 = scmp.eq.s32.totalorder %s27, 1
      %p129 = por %p127, %p128
      %p130 = scmp.ne.s32.totalorder %s121, %s122
      %p131 = scmp.eq.s32.totalorder %s27, 0
      %p132 = por %p130, %p131
      %p133 = scmp.ne.s32.totalorder %s121, %s122
      %p134 = scmp.eq.s32.totalorder %s28, 1
      %p135 = por %p133, %p134
      %p137 = scmp.ne.s32.totalorder %s122, %s136
      %p138 = scmp.eq.s32.totalorder %s28, 0
      %p139 = por %p137, %p138
      %s141 = sadd.s32 %s140, 1
      %p144 = scmp.eq.s32.totalorder %s22, 1
      %p145 = scmp.ne.s32.totalorder %s140, %s142
      %p146 = scmp.eq.s32.totalorder %s22, 0
      %p147 = por %p145, %p146
      %p148 = scmp.ne.s32.totalorder %s140, %s142
      %p149 = scmp.eq.s32.totalorder %s27, 1
      %p150 = por %p148, %p149
      %p151 = scmp.ne.s32.totalorder %s142, %s143
      %p152 = scmp.eq.s32.totalorder %s27, 0
      %p153 = por %p151, %p152
      %p154 = scmp.ne.s32.totalorder %s142, %s143
      %p155 = scmp.eq.s32.totalorder %s28, 1
      %p156 = por %p154, %p155
      %p158 = scmp.ne.s32.totalorder %s143, %s157
      %p159 = scmp.eq.s32.totalorder %s28, 0
      %p160 = por %p158, %p159
      %s162 = sadd.s32 %s161, 1
      %p165 = scmp.eq.s32.totalorder %s22, 1
      %p166 = scmp.ne.s32.totalorder %s161, %s163
      %p167 = scmp.eq.s32.totalorder %s22, 0
      %p168 = por %p166, %p167
      %p169 = scmp.ne.s32.totalorder %s161, %s163
      %p170 = scmp.eq.s32.totalorder %s27, 1
      %p171 = por %p169, %p170
      %p172 = scmp.ne.s32.totalorder %s163, %s164
      %p173 = scmp.eq.s32.totalorder %s27, 0
      %p174 = por %p172, %p173
      %p175 = scmp.ne.s32.totalorder %s163, %s164
      %p176 = scmp.eq.s32.totalorder %s28, 1
      %p177 = por %p175, %p176
      %p179 = scmp.ne.s32.totalorder %s164, %s178
      %p180 = scmp.eq.s32.totalorder %s28, 0
      %p181 = por %p179, %p180
      %s183 = sadd.s32 %s182, 1
      %p186 = scmp.eq.s32.totalorder %s22, 1
      %p187 = scmp.ne.s32.totalorder %s182, %s184
      %p188 = scmp.eq.s32.totalorder %s22, 0
      %p189 = por %p187, %p188
      %p190 = scmp.ne.s32.totalorder %s182, %s184
      %p191 = scmp.eq.s32.totalorder %s27, 1
      %p192 = por %p190, %p191
      %p193 = scmp.ne.s32.totalorder %s184, %s185
      %p194 = scmp.eq.s32.totalorder %s27, 0
      %p195 = por %p193, %p194
      %p196 = scmp.ne.s32.totalorder %s184, %s185
      %p197 = scmp.eq.s32.totalorder %s28, 1
      %p198 = por %p196, %p197
      %p200 = scmp.ne.s32.totalorder %s185, %s199
      %p201 = scmp.eq.s32.totalorder %s28, 0
      %p202 = por %p200, %p201
      %s204 = sadd.s32 %s203, 1
      %p207 = scmp.eq.s32.totalorder %s22, 1
      %p208 = scmp.ne.s32.totalorder %s203, %s205
      %p209 = scmp.eq.s32.totalorder %s22, 0
      %p210 = por %p208, %p209
      %p211 = scmp.ne.s32.totalorder %s203, %s205
      %p212 = scmp.eq.s32.totalorder %s27, 1
      %p213 = por %p211, %p212
      %p214 = scmp.ne.s32.totalorder %s205, %s206
      %p215 = scmp.eq.s32.totalorder %s27, 0
      %p216 = por %p214, %p215
      %p217 = scmp.ne.s32.totalorder %s205, %s206
      %p218 = scmp.eq.s32.totalorder %s28, 1
      %p219 = por %p217, %p218
      %p221 = scmp.ne.s32.totalorder %s206, %s220
      %p222 = scmp.eq.s32.totalorder %s28, 0
      %p223 = por %p221, %p222
      %s225 = sadd.s32 %s224, 1
      %p228 = scmp.eq.s32.totalorder %s22, 1
      %p229 = scmp.ne.s32.totalorder %s224, %s226
      %p230 = scmp.eq.s32.totalorder %s22, 0
      %p231 = por %p229, %p230
      %p232 = scmp.ne.s32.totalorder %s224, %s226
      %p233 = scmp.eq.s32.totalorder %s27, 1
      %p234 = por %p232, %p233
      %p235 = scmp.ne.s32.totalorder %s226, %s227
      %p236 = scmp.eq.s32.totalorder %s27, 0
      %p237 = por %p235, %p236
      %p238 = scmp.ne.s32.totalorder %s226, %s227
      %p239 = scmp.eq.s32.totalorder %s28, 1
      %p240 = por %p238, %p239
      %p242 = scmp.ne.s32.totalorder %s227, %s241
      %p243 = scmp.eq.s32.totalorder %s28, 0
      %p244 = por %p242, %p243
      %s246 = sadd.s32 %s245, 1
      %p249 = scmp.eq.s32.totalorder %s22, 1
      %p250 = scmp.ne.s32.totalorder %s245, %s247
      %p251 = scmp.eq.s32.totalorder %s22, 0
      %p252 = por %p250, %p251
      %p253 = scmp.ne.s32.totalorder %s245, %s247
      %p254 = scmp.eq.s32.totalorder %s27, 1
      %p255 = por %p253, %p254
      %p256 = scmp.ne.s32.totalorder %s247, %s248
      %p257 = scmp.eq.s32.totalorder %s27, 0
      %p258 = por %p256, %p257
      %p259 = scmp.ne.s32.totalorder %s247, %s248
      %p260 = scmp.eq.s32.totalorder %s28, 1
      %p261 = por %p259, %p260
      %p263 = scmp.ne.s32.totalorder %s248, %s262
      %p264 = scmp.eq.s32.totalorder %s28, 0
      %p265 = por %p263, %p264
      %s266 = ssub.s32 %s22, %s29
      %p267 = scmp.eq.s32.totalorder %s266, 0
      %s269 = sadd.s32 %s268, 1
      %s270 = scalar_select %p267, %s268, %s269
      %p273 = pneg %p267
      %p274 = scmp.eq.s32.totalorder %s22, 1
      %p275 = por %p273, %p274
      %p276 = scmp.ne.s32.totalorder %s268, %s271
      %p277 = scmp.eq.s32.totalorder %s22, 0
      %p278 = por %p276, %p277
      %p279 = scmp.ne.s32.totalorder %s268, %s271
      %p280 = scmp.eq.s32.totalorder %s27, 1
      %p281 = por %p279, %p280
      %p282 = scmp.ne.s32.totalorder %s271, %s272
      %p283 = scmp.eq.s32.totalorder %s27, 0
      %p284 = por %p282, %p283
      %p285 = scmp.ne.s32.totalorder %s271, %s272
      %p286 = scmp.eq.s32.totalorder %s28, 1
      %p287 = por %p285, %p286
      %p289 = scmp.ne.s32.totalorder %s272, %s288
      %p290 = scmp.eq.s32.totalorder %s28, 0
      %p291 = por %p289, %p290
      %p292 = scmp.le.s32.totalorder 1, %s22
      %p293 = scmp.lt.s32.totalorder %s22, 3
      %p294 = pnand %p292, %p293
      %p295 = pneg %p294
      // Predicated region
      $region9: #{tpu_custom_call.1} parent=5 // pred_check
        _
      $region10: #{tpu_custom_call.1} parent=5 // pred_check_branch
        %297 = sbr.rel (%p294) target = $region12
      $region11: #{tpu_custom_call.1} parent=5 // pred_region
        %s298 = ssub.s32 %s22, 1
        // Predicated region
        $region13: #{tpu_custom_call.1} parent=11 // pred_check
          %p299 = pneg %p69
        $region14: #{tpu_custom_call.1} parent=11 // pred_check_branch
          %301 = sbr.rel (%p299) target = $region16
        $region15: #{tpu_custom_call.1} parent=11 // pred_region
          _
        $region16: #{tpu_custom_call.1} parent=11 // pred_fallthru
          _
        // Predicated region
        $region17: #{tpu_custom_call.1} parent=11 // pred_check
          %p302 = pneg %p90
        $region18: #{tpu_custom_call.1} parent=11 // pred_check_branch
          %304 = sbr.rel (%p302) target = $region20
        $region19: #{tpu_custom_call.1} parent=11 // pred_region
          _
        $region20: #{tpu_custom_call.1} parent=11 // pred_fallthru
          _
        // Predicated region
        $region21: #{tpu_custom_call.1} parent=11 // pred_check
          %p305 = pneg %p111
        $region22: #{tpu_custom_call.1} parent=11 // pred_check_branch
          %307 = sbr.rel (%p305) target = $region24
        $region23: #{tpu_custom_call.1} parent=11 // pred_region
          _
        $region24: #{tpu_custom_call.1} parent=11 // pred_fallthru
          _
        // Predicated region
        $region25: #{tpu_custom_call.1} parent=11 // pred_check
          %p308 = pneg %p132
        $region26: #{tpu_custom_call.1} parent=11 // pred_check_branch
          %310 = sbr.rel (%p308) target = $region28
        $region27: #{tpu_custom_call.1} parent=11 // pred_region
          _
        $region28: #{tpu_custom_call.1} parent=11 // pred_fallthru
          _
        // Predicated region
        $region29: #{tpu_custom_call.1} parent=11 // pred_check
          %p311 = pneg %p153
        $region30: #{tpu_custom_call.1} parent=11 // pred_check_branch
          %313 = sbr.rel (%p311) target = $region32
        $region31: #{tpu_custom_call.1} parent=11 // pred_region
          %s315 = ssub.s32 1024, 1024
          %316 = vsyncadd [#allocation3], %s315
          %s317 = sshll.u32 [#allocation2], 4
          %s318 = int_to_ptr.vmem [resolvable:$true] %s317
          %323 = dma.hbm_to_vmem [thread:$0]  %s5, 1024, %s318, [#allocation3], 64, 64, 4
        $region32: #{tpu_custom_call.1} parent=11 // pred_fallthru
          _
        // Predicated region
        $region33: #{tpu_custom_call.1} parent=11 // pred_check
          %p324 = pneg %p174
        $region34: #{tpu_custom_call.1} parent=11 // pred_check_branch
          %326 = sbr.rel (%p324) target = $region36
        $region35: #{tpu_custom_call.1} parent=11 // pred_region
          _
        $region36: #{tpu_custom_call.1} parent=11 // pred_fallthru
          _
        // Predicated region
        $region37: #{tpu_custom_call.1} parent=11 // pred_check
          %p327 = pneg %p195
        $region38: #{tpu_custom_call.1} parent=11 // pred_check_branch
          %329 = sbr.rel (%p327) target = $region40
        $region39: #{tpu_custom_call.1} parent=11 // pred_region
          %s331 = ssub.s32 1024, 1024
          %332 = vsyncadd [#allocation6], %s331
          %s333 = sshll.u32 [#allocation5], 4
          %s334 = int_to_ptr.vmem [resolvable:$true] %s333
          %339 = dma.hbm_to_vmem [thread:$0]  %s7, 1024, %s334, [#allocation6], 64, 64, 4
        $region40: #{tpu_custom_call.1} parent=11 // pred_fallthru
          _
        // Predicated region
        $region41: #{tpu_custom_call.1} parent=11 // pred_check
          %p340 = pneg %p216
        $region42: #{tpu_custom_call.1} parent=11 // pred_check_branch
          %342 = sbr.rel (%p340) target = $region44
        $region43: #{tpu_custom_call.1} parent=11 // pred_region
          _
        $region44: #{tpu_custom_call.1} parent=11 // pred_fallthru
          _
        // Predicated region
        $region45: #{tpu_custom_call.1} parent=11 // pred_check
          %p343 = pneg %p237
        $region46: #{tpu_custom_call.1} parent=11 // pred_check_branch
          %345 = sbr.rel (%p343) target = $region48
        $region47: #{tpu_custom_call.1} parent=11 // pred_region
          %s347 = ssub.s32 1024, 1024
          %348 = vsyncadd [#allocation6], %s347
          %s349 = sshll.u32 [#allocation7], 4
          %s350 = int_to_ptr.vmem [resolvable:$true] %s349
          %355 = dma.hbm_to_vmem [thread:$0]  %s9, 1024, %s350, [#allocation6], 64, 64, 4
        $region48: #{tpu_custom_call.1} parent=11 // pred_fallthru
          _
        // Predicated region
        $region49: #{tpu_custom_call.1} parent=11 // pred_check
          %p356 = pneg %p258
        $region50: #{tpu_custom_call.1} parent=11 // pred_check_branch
          %358 = sbr.rel (%p356) target = $region52
        $region51: #{tpu_custom_call.1} parent=11 // pred_region
          _
        $region52: #{tpu_custom_call.1} parent=11 // pred_fallthru
          _
      $region12: #{tpu_custom_call.1} parent=5 // pred_fallthru
        _
      %p359 = scmp.lt.s32.totalorder %s22, 2
      // Predicated region
      $region53: #{tpu_custom_call.1} parent=5 // pred_check
        %p360 = pneg %p359
      $region54: #{tpu_custom_call.1} parent=5 // pred_check_branch
        %362 = sbr.rel (%p360) target = $region56
      $region55: #{tpu_custom_call.1} parent=5 // pred_region
        // Predicated region
        $region57: #{tpu_custom_call.1} parent=55 // pred_check
          %p363 = pneg %p42
        $region58: #{tpu_custom_call.1} parent=55 // pred_check_branch
          %365 = sbr.rel (%p363) target = $region60
        $region59: #{tpu_custom_call.1} parent=55 // pred_region
          %s366 = smul.u32 4, %s22
          %p367 = scmp.lt.s32.totalorder %s366, 7
          %s368 = scalar_select %p367, %s366, 7
          %s369 = smul.addr %s368, 8
          %s370 = scalar_lea.vmem %s0, %s369
          %s371 = smul.u32 4, %s22
        $region60: #{tpu_custom_call.1} parent=55 // pred_fallthru
          _
      $region56: #{tpu_custom_call.1} parent=5 // pred_fallthru
        _
      %p372 = scmp.le.s32.totalorder 1, %s22
      %p373 = scmp.lt.s32.totalorder %s22, 3
      %p374 = pnand %p372, %p373
      %p375 = pneg %p374
      // Predicated region
      $region61: #{tpu_custom_call.1} parent=5 // pred_check
        _
      $region62: #{tpu_custom_call.1} parent=5 // pred_check_branch
        %377 = sbr.rel (%p374) target = $region64
      $region63: #{tpu_custom_call.1} parent=5 // pred_region
        %s378 = ssub.s32 %s22, 1
        // Predicated region
        $region65: #{tpu_custom_call.1} parent=63 // pred_check
          %p379 = pneg %p153
        $region66: #{tpu_custom_call.1} parent=63 // pred_check_branch
          %381 = sbr.rel (%p379) target = $region68
        $region67: #{tpu_custom_call.1} parent=63 // pred_region
          %382 = dma.done [#allocation3], 1024
        $region68: #{tpu_custom_call.1} parent=63 // pred_fallthru
          _
        // Predicated region
        $region69: #{tpu_custom_call.1} parent=63 // pred_check
          %p383 = pneg %p195
        $region70: #{tpu_custom_call.1} parent=63 // pred_check_branch
          %385 = sbr.rel (%p383) target = $region72
        $region71: #{tpu_custom_call.1} parent=63 // pred_region
          %386 = dma.done [#allocation6], 1024
        $region72: #{tpu_custom_call.1} parent=63 // pred_fallthru
          _
        // Predicated region
        $region73: #{tpu_custom_call.1} parent=63 // pred_check
          %p387 = pneg %p237
        $region74: #{tpu_custom_call.1} parent=63 // pred_check_branch
          %389 = sbr.rel (%p387) target = $region76
        $region75: #{tpu_custom_call.1} parent=63 // pred_region
          %390 = dma.done [#allocation6], 1024
        $region76: #{tpu_custom_call.1} parent=63 // pred_fallthru
          _
        %s391 = smul.u32 4, %s27
        %p392 = scmp.lt.s32.totalorder %s391, 7
        %s393 = scalar_select %p392, %s391, 7
        %s394 = smul.addr %s393, 8
        %s395 = scalar_lea.vmem %s0, %s394
        %p396 = pneg %p48
        %p397 = pneg %p45
        %p398 = pneg %p69
        %p399 = pneg %p66
        %p400 = pneg %p90
        %p401 = pneg %p87
        %p402 = pneg %p111
        %p403 = pneg %p108
        %p404 = pneg %p132
        %p405 = pneg %p129
        %p406 = pneg %p153
        %p407 = pneg %p150
        %p408 = pneg %p174
        %p409 = pneg %p171
        %p410 = pneg %p195
        %p411 = pneg %p192
        %p412 = pneg %p216
        %p413 = pneg %p213
        %p414 = pneg %p237
        %p415 = pneg %p234
        %p416 = pneg %p258
        %p417 = pneg %p255
        %p418 = pneg %p284
        %p419 = pneg %p281
        %s420 = sand.u32 %s271, 1
        %s421 = scalar_lea.sflag [#allocation4], %s420
        %s422 = sand.u32 %s271, 1
        %s423 = smul.addr %s422, 32
        %s424 = scalar_lea.vmem [#allocation8], %s423
        %s425 = smul.u32 4, %s27
        %p426 = scmp.lt.s32.totalorder %s425, 7
        %s427 = scalar_select %p426, %s425, 7
        %s428 = smul.addr %s427, 8
        %s429 = scalar_lea.vmem %s0, %s428
        %s430 = smul.u32 4, %s27
        %s431 = smul.u32 4, %s27
        %v433 = vld [vmem:[%s429] sm:$0xff]
        %v434 = vld [vmem:[%s429 + $0x8] sm:$0xff]
        %v435 = vld [vmem:[%s429 + $0x10] sm:$0xff]
        %v436 = vld [vmem:[%s429 + $0x18] sm:$0xff]
        %v437 = vcvt.f32.s32.to.zero.pseudo %v433
        %v438 = vcvt.f32.s32.to.zero.pseudo %v434
        %v439 = vcvt.f32.s32.to.zero.pseudo %v435
        %v440 = vcvt.f32.s32.to.zero.pseudo %v436
        %v441 = vpack.c.bf16 %v434, %v433
        %v442 = vpack.c.bf16 %v436, %v435
        %v443 = vlaneseq
        %v444 = vand.u32 %v443, 127
        %445 = vset.pattern.permute.xlu0 0
        %446 = vperm.xlu0 %445, %v437
        %v447 = vpop.permute.xlu0 %446
        %448 = vset.pattern.permute.xlu0 0
        %449 = vperm.xlu0 %448, %v438
        %v450 = vpop.permute.xlu0 %449
        %451 = vset.pattern.permute.xlu0 0
        %452 = vperm.xlu0 %451, %v439
        %v453 = vpop.permute.xlu0 %452
        %454 = vset.pattern.permute.xlu0 0
        %455 = vperm.xlu0 %454, %v440
        %v456 = vpop.permute.xlu0 %455
        %vm457 = vcmp.eq.s32.totalorder %v444, %v447
        %vm458 = vcmp.eq.s32.totalorder %v444, %v450
        %vm459 = vcmp.eq.s32.totalorder %v444, %v453
        %vm460 = vcmp.eq.s32.totalorder %v444, %v456
        %v461 = vadd.s32 %v437, 8
        %v462 = vadd.s32 %v438, 8
        %v463 = vadd.s32 %v439, 8
        %v464 = vadd.s32 %v440, 8
        %465 = vset.pattern.permute.xlu0 1
        %466 = vperm.xlu0 %465, %v461
        %v467 = vpop.permute.xlu0 %466
        %468 = vset.pattern.permute.xlu0 1
        %469 = vperm.xlu0 %468, %v462
        %v470 = vpop.permute.xlu0 %469
        %471 = vset.pattern.permute.xlu0 1
        %472 = vperm.xlu0 %471, %v463
        %v473 = vpop.permute.xlu0 %472
        %474 = vset.pattern.permute.xlu0 1
        %475 = vperm.xlu0 %474, %v464
        %v476 = vpop.permute.xlu0 %475
        %vm477 = vcmp.eq.s32.totalorder %v444, %v467
        %vm478 = vcmp.eq.s32.totalorder %v444, %v470
        %vm479 = vcmp.eq.s32.totalorder %v444, %v473
        %vm480 = vcmp.eq.s32.totalorder %v444, %v476
        %vm481 = vmor %vm457, %vm477
        %vm482 = vmor %vm458, %vm478
        %vm483 = vmor %vm459, %vm479
        %vm484 = vmor %vm460, %vm480
        %v485 = vadd.s32 %v437, 20
        %v486 = vadd.s32 %v438, 20
        %v487 = vadd.s32 %v439, 20
        %v488 = vadd.s32 %v440, 20
        %489 = vset.pattern.permute.xlu0 2
        %490 = vperm.xlu0 %489, %v485
        %v491 = vpop.permute.xlu0 %490
        %492 = vset.pattern.permute.xlu0 2
        %493 = vperm.xlu0 %492, %v486
        %v494 = vpop.permute.xlu0 %493
        %495 = vset.pattern.permute.xlu0 2
        %496 = vperm.xlu0 %495, %v487
        %v497 = vpop.permute.xlu0 %496
        %498 = vset.pattern.permute.xlu0 2
        %499 = vperm.xlu0 %498, %v488
        %v500 = vpop.permute.xlu0 %499
        %vm501 = vcmp.eq.s32.totalorder %v444, %v491
        %vm502 = vcmp.eq.s32.totalorder %v444, %v494
        %vm503 = vcmp.eq.s32.totalorder %v444, %v497
        %vm504 = vcmp.eq.s32.totalorder %v444, %v500
        %vm505 = vmor %vm481, %vm501
        %vm506 = vmor %vm482, %vm502
        %vm507 = vmor %vm483, %vm503
        %vm508 = vmor %vm484, %vm504
        %v509 = vadd.s32 %v437, 30
        %v510 = vadd.s32 %v438, 30
        %v511 = vadd.s32 %v439, 30
        %v512 = vadd.s32 %v440, 30
        %513 = vset.pattern.permute.xlu0 3
        %514 = vperm.xlu0 %513, %v509
        %v515 = vpop.permute.xlu0 %514
        %516 = vset.pattern.permute.xlu0 3
        %517 = vperm.xlu0 %516, %v510
        %v518 = vpop.permute.xlu0 %517
        %519 = vset.pattern.permute.xlu0 3
        %520 = vperm.xlu0 %519, %v511
        %v521 = vpop.permute.xlu0 %520
        %522 = vset.pattern.permute.xlu0 3
        %523 = vperm.xlu0 %522, %v512
        %v524 = vpop.permute.xlu0 %523
        %vm525 = vcmp.eq.s32.totalorder %v444, %v515
        %vm526 = vcmp.eq.s32.totalorder %v444, %v518
        %vm527 = vcmp.eq.s32.totalorder %v444, %v521
        %vm528 = vcmp.eq.s32.totalorder %v444, %v524
        %vm529 = vmor %vm505, %vm525
        %vm530 = vmor %vm506, %vm526
        %vm531 = vmor %vm507, %vm527
        %vm532 = vmor %vm508, %vm528
        %v533 = vsel %vm529, 1, 0
        %v534 = vsel %vm530, 1, 0
        %v535 = vsel %vm531, 1, 0
        %v536 = vsel %vm532, 1, 0
        %v537 = vcvt.s32.f32 %v533
        %v538 = vcvt.s32.f32 %v534
        %v539 = vcvt.s32.f32 %v535
        %v540 = vcvt.s32.f32 %v536
        %v541 = vpack.c.bf16 %v538, %v537
        %v542 = vpack.c.bf16 %v540, %v539
        %545 = vrot.lane.b32.xlu0 %v441, 28
        %v546 = vpop.permute.xlu0 %545
        %547 = vrot.lane.b32.xlu0 %v442, 28
        %v548 = vpop.permute.xlu0 %547
        %vm549 = vcmask 261120
        %v552 = vsel %vm549, %v541, %v546
        %v555 = vsel %vm549, %v542, %v548
        %v556 = vld [vmem:[%s1] sm:$0xf]
        %v557 = vld [vmem:[%s1 + $0x4] sm:$0xf]
        %v558 = vld [vmem:[%s1 + $0x8] sm:$0xf]
        %v559 = vld [vmem:[%s1 + $0xc] sm:$0xf]
        %v560 = vld [vmem:[%s1 + $0x10] sm:$0xf]
        %v561 = vld [vmem:[%s2] sm:$0x1]
        %v563 = vlaneseq
        %v564 = vshrl.u32 %v563, 7
        %v565 = vsub.s32 0, %v564
        %v566 = vrot.slane %v561, %v565
        %v573 = vunpack.c.l.b16 %v556
        %v574 = vunpack.c.l.b16 %v557
        %v575 = vunpack.c.l.b16 %v558
        %v576 = vunpack.c.l.b16 %v559
        %v577 = vunpack.c.l.b16 %v560
        %v578 = vpack.c.b16 %v574, %v573
        %v579 = vpack.c.b16 %v576, %v575
        %v580 = vpack.c.b16 %v577, %v577
        %vm583 = vcmask 326656
        %v584 = vsel %vm583, %v552, 0
        %v586 = vsel %vm583, %v555, 0
        %vm588 = vcmask 1043456
        %v590 = vsel %vm588, %v580, 0
        %592 = vmatprep.subr.bf16.mxu0 0
        %593 = vmatpush1.bf16.msra.mxu0 %v578
        %594 = vmatprep.subr.bf16.mxu0 0
        %595 = vmatpush1.bf16.msra.mxu0 %v579
        %596 = vmatprep.subr.bf16.mxu0 0
        %597 = vmatpush1.bf16.msra.mxu0 %v590
        %598 = vmatprep.subr.bf16.mxu0 0
        %599 = vmatpush1.bf16.msra.mxu0 0
        %600 = vmatprep.subr.bf16.mxu0 0
        %601 = vmatpush1.bf16.msra.mxu0 0
        %602 = vmatprep.subr.bf16.mxu0 0
        %603 = vmatpush1.bf16.msra.mxu0 0
        %604 = vmatprep.subr.bf16.mxu0 0
        %605 = vmatpush1.bf16.msra.mxu0 0
        %606 = vmatprep.subr.bf16.mxu0 0
        %607 = vmatpush1.bf16.msra.mxu0 0
        %608 = vmatprep.subr.bf16.mxu0 0
        %609 = vmatpush1.bf16.msra.mxu0 0
        %610 = vmatprep.subr.bf16.mxu0 0
        %611 = vmatpush1.bf16.msra.mxu0 0
        %612 = vmatprep.subr.bf16.mxu0 0
        %613 = vmatpush1.bf16.msra.mxu0 0
        %614 = vmatprep.subr.bf16.mxu0 0
        %615 = vmatpush1.bf16.msra.mxu0 0
        %616 = vmatprep.subr.bf16.mxu0 0
        %617 = vmatpush1.bf16.msra.mxu0 0
        %618 = vmatprep.subr.bf16.mxu0 0
        %619 = vmatpush1.bf16.msra.mxu0 0
        %620 = vmatprep.subr.bf16.mxu0 0
        %621 = vmatpush1.bf16.msra.mxu0 0
        %622 = vmatprep.subr.bf16.mxu0 0
        %623 = vmatpush1.bf16.msra.mxu0 0
        %624 = vmatprep.mubr.bf16.mxu0 0
        %625 = vmatmul.mubr.bf16.gmra.mrb[0].mxu0 %v584
        %v626 = vpop.f32.mrb[0].mxu0
        %v627 = vadd.f32 %v566, %v626
        %v628 = vpop.f32.mrb[0].mxu0
        %v629 = vpop.f32.mrb[0].mxu0
        %v630 = vadd.f32 %v566, %v629
        %v631 = vpop.f32.mrb[0].mxu0
        %632 = vmatprep.mubr.bf16.mxu0 0
        %633 = vmatmul.mubr.bf16.gmra.mrb[0].mxu0 %v586
        %v634 = vpop.f32.mrb[0].mxu0
        %v635 = vadd.f32 %v566, %v634
        %v636 = vpop.f32.mrb[0].mxu0
        %v637 = vpop.f32.mrb[0].mxu0
        %v638 = vadd.f32 %v566, %v637
        %v639 = vpop.f32.mrb[0].mxu0
        %640 = vdwg.mxu0
        %v641 = vmax.f32 %v627, 0.0
        %v642 = vmax.f32 %v630, 0.0
        %v643 = vmax.f32 %v635, 0.0
        %v644 = vmax.f32 %v638, 0.0
        %v645 = vpack.c.bf16 %v642, %v641
        %v646 = vpack.c.bf16 %v644, %v643
        %v647 = vld [vmem:[%s3] sm:$0xf]
        %v648 = vld [vmem:[%s3 + $0x4] sm:$0xf]
        %v649 = vld [vmem:[%s3 + $0x8] sm:$0xf]
        %v650 = vld [vmem:[%s3 + $0xc] sm:$0xf]
        %v651 = vld [vmem:[%s3 + $0x10] sm:$0xf]
        %v652 = vld [vmem:[%s3 + $0x14] sm:$0xf]
        %v653 = vld [vmem:[%s3 + $0x18] sm:$0xf]
        %v654 = vld [vmem:[%s3 + $0x1c] sm:$0xf]
        %v655 = vld [vmem:[%s3 + $0x20] sm:$0xf]
        %v656 = vld [vmem:[%s3 + $0x24] sm:$0xf]
        %v657 = vld [vmem:[%s3 + $0x28] sm:$0xf]
        %v658 = vld [vmem:[%s3 + $0x2c] sm:$0xf]
        %v659 = vld [vmem:[%s3 + $0x30] sm:$0xf]
        %v660 = vld [vmem:[%s3 + $0x34] sm:$0xf]
        %v661 = vld [vmem:[%s3 + $0x38] sm:$0xf]
        %v662 = vld [vmem:[%s3 + $0x3c] sm:$0xf]
        %v663 = vld [vmem:[%s4] sm:$0x1]
        %v665 = vlaneseq
        %v666 = vshrl.u32 %v665, 7
        %v667 = vsub.s32 0, %v666
        %v668 = vrot.slane %v663, %v667
        %v686 = vunpack.c.l.b16 %v647
        %v687 = vunpack.c.l.b16 %v648
        %v688 = vunpack.c.l.b16 %v649
        %v689 = vunpack.c.l.b16 %v650
        %v690 = vunpack.c.l.b16 %v651
        %v691 = vunpack.c.l.b16 %v652
        %v692 = vunpack.c.l.b16 %v653
        %v693 = vunpack.c.l.b16 %v654
        %v694 = vunpack.c.l.b16 %v655
        %v695 = vunpack.c.l.b16 %v656
        %v696 = vunpack.c.l.b16 %v657
        %v697 = vunpack.c.l.b16 %v658
        %v698 = vunpack.c.l.b16 %v659
        %v699 = vunpack.c.l.b16 %v660
        %v700 = vunpack.c.l.b16 %v661
        %v701 = vunpack.c.l.b16 %v662
        %v702 = vpack.c.b16 %v687, %v686
        %v703 = vpack.c.b16 %v689, %v688
        %v704 = vpack.c.b16 %v691, %v690
        %v705 = vpack.c.b16 %v693, %v692
        %v706 = vpack.c.b16 %v695, %v694
        %v707 = vpack.c.b16 %v697, %v696
        %v708 = vpack.c.b16 %v699, %v698
        %v709 = vpack.c.b16 %v701, %v700
        %718 = vmatprep.subr.bf16.mxu0 0
        %719 = vmatpush1.bf16.msra.mxu0 %v702
        %720 = vmatprep.subr.bf16.mxu0 0
        %721 = vmatpush1.bf16.msra.mxu0 %v703
        %722 = vmatprep.subr.bf16.mxu0 0
        %723 = vmatpush1.bf16.msra.mxu0 %v704
        %724 = vmatprep.subr.bf16.mxu0 0
        %725 = vmatpush1.bf16.msra.mxu0 %v705
        %726 = vmatprep.subr.bf16.mxu0 0
        %727 = vmatpush1.bf16.msra.mxu0 %v706
        %728 = vmatprep.subr.bf16.mxu0 0
        %729 = vmatpush1.bf16.msra.mxu0 %v707
        %730 = vmatprep.subr.bf16.mxu0 0
        %731 = vmatpush1.bf16.msra.mxu0 %v708
        %732 = vmatprep.subr.bf16.mxu0 0
        %733 = vmatpush1.bf16.msra.mxu0 %v709
        %734 = vmatprep.subr.bf16.mxu0 0
        %735 = vmatpush1.bf16.msra.mxu0 0
        %736 = vmatprep.subr.bf16.mxu0 0
        %737 = vmatpush1.bf16.msra.mxu0 0
        %738 = vmatprep.subr.bf16.mxu0 0
        %739 = vmatpush1.bf16.msra.mxu0 0
        %740 = vmatprep.subr.bf16.mxu0 0
        %741 = vmatpush1.bf16.msra.mxu0 0
        %742 = vmatprep.subr.bf16.mxu0 0
        %743 = vmatpush1.bf16.msra.mxu0 0
        %744 = vmatprep.subr.bf16.mxu0 0
        %745 = vmatpush1.bf16.msra.mxu0 0
        %746 = vmatprep.subr.bf16.mxu0 0
        %747 = vmatpush1.bf16.msra.mxu0 0
        %748 = vmatprep.subr.bf16.mxu0 0
        %749 = vmatpush1.bf16.msra.mxu0 0
        %750 = vmatprep.mubr.bf16.mxu0 0
        %751 = vmatmul.mubr.bf16.gmra.mrb[0].mxu0 %v645
        %v752 = vpop.f32.mrb[0].mxu0
        %v753 = vadd.f32 %v668, %v752
        %v754 = vpop.f32.mrb[0].mxu0
        %v755 = vpop.f32.mrb[0].mxu0
        %v756 = vadd.f32 %v668, %v755
        %v757 = vpop.f32.mrb[0].mxu0
        %758 = vmatprep.mubr.bf16.mxu0 0
        %759 = vmatmul.mubr.bf16.gmra.mrb[0].mxu0 %v646
        %v760 = vpop.f32.mrb[0].mxu0
        %v761 = vadd.f32 %v668, %v760
        %v762 = vpop.f32.mrb[0].mxu0
        %v763 = vpop.f32.mrb[0].mxu0
        %v764 = vadd.f32 %v668, %v763
        %v765 = vpop.f32.mrb[0].mxu0
        %766 = vdwg.mxu0
        %v767 = vmax.f32 %v753, 0.0
        %v768 = vmax.f32 %v756, 0.0
        %v769 = vmax.f32 %v761, 0.0
        %v770 = vmax.f32 %v764, 0.0
        %v771 = vpack.c.bf16 %v768, %v767
        %v772 = vpack.c.bf16 %v770, %v769
        %v773 = vld [vmem:[#allocation2] sm:$0xf]
        %v774 = vld [vmem:[#allocation2 + $0x4] sm:$0xf]
        %v775 = vld [vmem:[#allocation2 + $0x8] sm:$0xf]
        %v776 = vld [vmem:[#allocation2 + $0xc] sm:$0xf]
        %v777 = vld [vmem:[#allocation2 + $0x10] sm:$0xf]
        %v778 = vld [vmem:[#allocation2 + $0x14] sm:$0xf]
        %v779 = vld [vmem:[#allocation2 + $0x18] sm:$0xf]
        %v780 = vld [vmem:[#allocation2 + $0x1c] sm:$0xf]
        %v781 = vld [vmem:[#allocation2 + $0x20] sm:$0xf]
        %v782 = vld [vmem:[#allocation2 + $0x24] sm:$0xf]
        %v783 = vld [vmem:[#allocation2 + $0x28] sm:$0xf]
        %v784 = vld [vmem:[#allocation2 + $0x2c] sm:$0xf]
        %v785 = vld [vmem:[#allocation2 + $0x30] sm:$0xf]
        %v786 = vld [vmem:[#allocation2 + $0x34] sm:$0xf]
        %v787 = vld [vmem:[#allocation2 + $0x38] sm:$0xf]
        %v788 = vld [vmem:[#allocation2 + $0x3c] sm:$0xf]
        %v789 = vld [vmem:[%s6] sm:$0x1]
        %v791 = vlaneseq
        %v792 = vshrl.u32 %v791, 7
        %v793 = vsub.s32 0, %v792
        %v794 = vrot.slane %v789, %v793
        %v812 = vunpack.c.l.b16 %v773
        %v813 = vunpack.c.l.b16 %v774
        %v814 = vunpack.c.l.b16 %v775
        %v815 = vunpack.c.l.b16 %v776
        %v816 = vunpack.c.l.b16 %v777
        %v817 = vunpack.c.l.b16 %v778
        %v818 = vunpack.c.l.b16 %v779
        %v819 = vunpack.c.l.b16 %v780
        %v820 = vunpack.c.l.b16 %v781
        %v821 = vunpack.c.l.b16 %v782
        %v822 = vunpack.c.l.b16 %v783
        %v823 = vunpack.c.l.b16 %v784
        %v824 = vunpack.c.l.b16 %v785
        %v825 = vunpack.c.l.b16 %v786
        %v826 = vunpack.c.l.b16 %v787
        %v827 = vunpack.c.l.b16 %v788
        %v828 = vpack.c.b16 %v813, %v812
        %v829 = vpack.c.b16 %v815, %v814
        %v830 = vpack.c.b16 %v817, %v816
        %v831 = vpack.c.b16 %v819, %v818
        %v832 = vpack.c.b16 %v821, %v820
        %v833 = vpack.c.b16 %v823, %v822
        %v834 = vpack.c.b16 %v825, %v824
        %v835 = vpack.c.b16 %v827, %v826
        %844 = vmatprep.subr.bf16.mxu0 0
        %845 = vmatpush1.bf16.msra.mxu0 %v828
        %846 = vmatprep.subr.bf16.mxu0 0
        %847 = vmatpush1.bf16.msra.mxu0 %v829
        %848 = vmatprep.subr.bf16.mxu0 0
        %849 = vmatpush1.bf16.msra.mxu0 %v830
        %850 = vmatprep.subr.bf16.mxu0 0
        %851 = vmatpush1.bf16.msra.mxu0 %v831
        %852 = vmatprep.subr.bf16.mxu0 0
        %853 = vmatpush1.bf16.msra.mxu0 %v832
        %854 = vmatprep.subr.bf16.mxu0 0
        %855 = vmatpush1.bf16.msra.mxu0 %v833
        %856 = vmatprep.subr.bf16.mxu0 0
        %857 = vmatpush1.bf16.msra.mxu0 %v834
        %858 = vmatprep.subr.bf16.mxu0 0
        %859 = vmatpush1.bf16.msra.mxu0 %v835
        %860 = vmatprep.subr.bf16.mxu0 0
        %861 = vmatpush1.bf16.msra.mxu0 0
        %862 = vmatprep.subr.bf16.mxu0 0
        %863 = vmatpush1.bf16.msra.mxu0 0
        %864 = vmatprep.subr.bf16.mxu0 0
        %865 = vmatpush1.bf16.msra.mxu0 0
        %866 = vmatprep.subr.bf16.mxu0 0
        %867 = vmatpush1.bf16.msra.mxu0 0
        %868 = vmatprep.subr.bf16.mxu0 0
        %869 = vmatpush1.bf16.msra.mxu0 0
        %870 = vmatprep.subr.bf16.mxu0 0
        %871 = vmatpush1.bf16.msra.mxu0 0
        %872 = vmatprep.subr.bf16.mxu0 0
        %873 = vmatpush1.bf16.msra.mxu0 0
        %874 = vmatprep.subr.bf16.mxu0 0
        %875 = vmatpush1.bf16.msra.mxu0 0
        %876 = vmatprep.mubr.bf16.mxu0 0
        %877 = vmatmul.mubr.bf16.gmra.mrb[0].mxu0 %v771
        %v878 = vpop.f32.mrb[0].mxu0
        %v879 = vadd.f32 %v794, %v878
        %v880 = vpop.f32.mrb[0].mxu0
        %v881 = vpop.f32.mrb[0].mxu0
        %v882 = vadd.f32 %v794, %v881
        %v883 = vpop.f32.mrb[0].mxu0
        %884 = vmatprep.mubr.bf16.mxu0 0
        %885 = vmatmul.mubr.bf16.gmra.mrb[0].mxu0 %v772
        %v886 = vpop.f32.mrb[0].mxu0
        %v887 = vadd.f32 %v794, %v886
        %v888 = vpop.f32.mrb[0].mxu0
        %v889 = vpop.f32.mrb[0].mxu0
        %v890 = vadd.f32 %v794, %v889
        %v891 = vpop.f32.mrb[0].mxu0
        %892 = vdwg.mxu0
        %v893 = vmax.f32 %v879, 0.0
        %v894 = vmax.f32 %v882, 0.0
        %v895 = vmax.f32 %v887, 0.0
        %v896 = vmax.f32 %v890, 0.0
        %v897 = vpack.c.bf16 %v894, %v893
        %v898 = vpack.c.bf16 %v896, %v895
        %v899 = vld [vmem:[#allocation5] sm:$0xf]
        %v900 = vld [vmem:[#allocation5 + $0x4] sm:$0xf]
        %v901 = vld [vmem:[#allocation5 + $0x8] sm:$0xf]
        %v902 = vld [vmem:[#allocation5 + $0xc] sm:$0xf]
        %v903 = vld [vmem:[#allocation5 + $0x10] sm:$0xf]
        %v904 = vld [vmem:[#allocation5 + $0x14] sm:$0xf]
        %v905 = vld [vmem:[#allocation5 + $0x18] sm:$0xf]
        %v906 = vld [vmem:[#allocation5 + $0x1c] sm:$0xf]
        %v907 = vld [vmem:[#allocation5 + $0x20] sm:$0xf]
        %v908 = vld [vmem:[#allocation5 + $0x24] sm:$0xf]
        %v909 = vld [vmem:[#allocation5 + $0x28] sm:$0xf]
        %v910 = vld [vmem:[#allocation5 + $0x2c] sm:$0xf]
        %v911 = vld [vmem:[#allocation5 + $0x30] sm:$0xf]
        %v912 = vld [vmem:[#allocation5 + $0x34] sm:$0xf]
        %v913 = vld [vmem:[#allocation5 + $0x38] sm:$0xf]
        %v914 = vld [vmem:[#allocation5 + $0x3c] sm:$0xf]
        %v915 = vld [vmem:[%s8] sm:$0x1]
        %v917 = vlaneseq
        %v918 = vshrl.u32 %v917, 7
        %v919 = vsub.s32 0, %v918
        %v920 = vrot.slane %v915, %v919
        %v938 = vunpack.c.l.b16 %v899
        %v939 = vunpack.c.l.b16 %v900
        %v940 = vunpack.c.l.b16 %v901
        %v941 = vunpack.c.l.b16 %v902
        %v942 = vunpack.c.l.b16 %v903
        %v943 = vunpack.c.l.b16 %v904
        %v944 = vunpack.c.l.b16 %v905
        %v945 = vunpack.c.l.b16 %v906
        %v946 = vunpack.c.l.b16 %v907
        %v947 = vunpack.c.l.b16 %v908
        %v948 = vunpack.c.l.b16 %v909
        %v949 = vunpack.c.l.b16 %v910
        %v950 = vunpack.c.l.b16 %v911
        %v951 = vunpack.c.l.b16 %v912
        %v952 = vunpack.c.l.b16 %v913
        %v953 = vunpack.c.l.b16 %v914
        %v954 = vpack.c.b16 %v939, %v938
        %v955 = vpack.c.b16 %v941, %v940
        %v956 = vpack.c.b16 %v943, %v942
        %v957 = vpack.c.b16 %v945, %v944
        %v958 = vpack.c.b16 %v947, %v946
        %v959 = vpack.c.b16 %v949, %v948
        %v960 = vpack.c.b16 %v951, %v950
        %v961 = vpack.c.b16 %v953, %v952
        %970 = vmatprep.subr.bf16.mxu0 0
        %971 = vmatpush1.bf16.msra.mxu0 %v954
        %972 = vmatprep.subr.bf16.mxu0 0
        %973 = vmatpush1.bf16.msra.mxu0 %v955
        %974 = vmatprep.subr.bf16.mxu0 0
        %975 = vmatpush1.bf16.msra.mxu0 %v956
        %976 = vmatprep.subr.bf16.mxu0 0
        %977 = vmatpush1.bf16.msra.mxu0 %v957
        %978 = vmatprep.subr.bf16.mxu0 0
        %979 = vmatpush1.bf16.msra.mxu0 %v958
        %980 = vmatprep.subr.bf16.mxu0 0
        %981 = vmatpush1.bf16.msra.mxu0 %v959
        %982 = vmatprep.subr.bf16.mxu0 0
        %983 = vmatpush1.bf16.msra.mxu0 %v960
        %984 = vmatprep.subr.bf16.mxu0 0
        %985 = vmatpush1.bf16.msra.mxu0 %v961
        %986 = vmatprep.subr.bf16.mxu0 0
        %987 = vmatpush1.bf16.msra.mxu0 0
        %988 = vmatprep.subr.bf16.mxu0 0
        %989 = vmatpush1.bf16.msra.mxu0 0
        %990 = vmatprep.subr.bf16.mxu0 0
        %991 = vmatpush1.bf16.msra.mxu0 0
        %992 = vmatprep.subr.bf16.mxu0 0
        %993 = vmatpush1.bf16.msra.mxu0 0
        %994 = vmatprep.subr.bf16.mxu0 0
        %995 = vmatpush1.bf16.msra.mxu0 0
        %996 = vmatprep.subr.bf16.mxu0 0
        %997 = vmatpush1.bf16.msra.mxu0 0
        %998 = vmatprep.subr.bf16.mxu0 0
        %999 = vmatpush1.bf16.msra.mxu0 0
        %1000 = vmatprep.subr.bf16.mxu0 0
        %1001 = vmatpush1.bf16.msra.mxu0 0
        %1002 = vmatprep.mubr.bf16.mxu0 0
        %1003 = vmatmul.mubr.bf16.gmra.mrb[0].mxu0 %v897
        %v1004 = vpop.f32.mrb[0].mxu0
        %v1005 = vadd.f32 %v920, %v1004
        %v1006 = vpop.f32.mrb[0].mxu0
        %v1007 = vpop.f32.mrb[0].mxu0
        %v1008 = vadd.f32 %v920, %v1007
        %v1009 = vpop.f32.mrb[0].mxu0
        %1010 = vmatprep.mubr.bf16.mxu0 0
        %1011 = vmatmul.mubr.bf16.gmra.mrb[0].mxu0 %v898
        %v1012 = vpop.f32.mrb[0].mxu0
        %v1013 = vadd.f32 %v920, %v1012
        %v1014 = vpop.f32.mrb[0].mxu0
        %v1015 = vpop.f32.mrb[0].mxu0
        %v1016 = vadd.f32 %v920, %v1015
        %v1017 = vpop.f32.mrb[0].mxu0
        %1018 = vdwg.mxu0
        %v1019 = vmax.f32 %v1005, 0.0
        %v1020 = vmax.f32 %v1008, 0.0
        %v1021 = vmax.f32 %v1013, 0.0
        %v1022 = vmax.f32 %v1016, 0.0
        %v1023 = vpack.c.bf16 %v1020, %v1019
        %v1024 = vpack.c.bf16 %v1022, %v1021
        %v1025 = vld [vmem:[#allocation7] sm:$0xf]
        %v1026 = vld [vmem:[#allocation7 + $0x4] sm:$0xf]
        %v1027 = vld [vmem:[#allocation7 + $0x8] sm:$0xf]
        %v1028 = vld [vmem:[#allocation7 + $0xc] sm:$0xf]
        %v1029 = vld [vmem:[#allocation7 + $0x10] sm:$0xf]
        %v1030 = vld [vmem:[#allocation7 + $0x14] sm:$0xf]
        %v1031 = vld [vmem:[#allocation7 + $0x18] sm:$0xf]
        %v1032 = vld [vmem:[#allocation7 + $0x1c] sm:$0xf]
        %v1033 = vld [vmem:[#allocation7 + $0x20] sm:$0xf]
        %v1034 = vld [vmem:[#allocation7 + $0x24] sm:$0xf]
        %v1035 = vld [vmem:[#allocation7 + $0x28] sm:$0xf]
        %v1036 = vld [vmem:[#allocation7 + $0x2c] sm:$0xf]
        %v1037 = vld [vmem:[#allocation7 + $0x30] sm:$0xf]
        %v1038 = vld [vmem:[#allocation7 + $0x34] sm:$0xf]
        %v1039 = vld [vmem:[#allocation7 + $0x38] sm:$0xf]
        %v1040 = vld [vmem:[#allocation7 + $0x3c] sm:$0xf]
        %v1041 = vld [vmem:[%s10] sm:$0x1]
        %v1043 = vlaneseq
        %v1044 = vshrl.u32 %v1043, 7
        %v1045 = vsub.s32 0, %v1044
        %v1046 = vrot.slane %v1041, %v1045
        %v1064 = vunpack.c.l.b16 %v1025
        %v1065 = vunpack.c.l.b16 %v1026
        %v1066 = vunpack.c.l.b16 %v1027
        %v1067 = vunpack.c.l.b16 %v1028
        %v1068 = vunpack.c.l.b16 %v1029
        %v1069 = vunpack.c.l.b16 %v1030
        %v1070 = vunpack.c.l.b16 %v1031
        %v1071 = vunpack.c.l.b16 %v1032
        %v1072 = vunpack.c.l.b16 %v1033
        %v1073 = vunpack.c.l.b16 %v1034
        %v1074 = vunpack.c.l.b16 %v1035
        %v1075 = vunpack.c.l.b16 %v1036
        %v1076 = vunpack.c.l.b16 %v1037
        %v1077 = vunpack.c.l.b16 %v1038
        %v1078 = vunpack.c.l.b16 %v1039
        %v1079 = vunpack.c.l.b16 %v1040
        %v1080 = vpack.c.b16 %v1065, %v1064
        %v1081 = vpack.c.b16 %v1067, %v1066
        %v1082 = vpack.c.b16 %v1069, %v1068
        %v1083 = vpack.c.b16 %v1071, %v1070
        %v1084 = vpack.c.b16 %v1073, %v1072
        %v1085 = vpack.c.b16 %v1075, %v1074
        %v1086 = vpack.c.b16 %v1077, %v1076
        %v1087 = vpack.c.b16 %v1079, %v1078
        %1096 = vmatprep.subr.bf16.mxu0 0
        %1097 = vmatpush1.bf16.msra.mxu0 %v1080
        %1098 = vmatprep.subr.bf16.mxu0 0
        %1099 = vmatpush1.bf16.msra.mxu0 %v1081
        %1100 = vmatprep.subr.bf16.mxu0 0
        %1101 = vmatpush1.bf16.msra.mxu0 %v1082
        %1102 = vmatprep.subr.bf16.mxu0 0
        %1103 = vmatpush1.bf16.msra.mxu0 %v1083
        %1104 = vmatprep.subr.bf16.mxu0 0
        %1105 = vmatpush1.bf16.msra.mxu0 %v1084
        %1106 = vmatprep.subr.bf16.mxu0 0
        %1107 = vmatpush1.bf16.msra.mxu0 %v1085
        %1108 = vmatprep.subr.bf16.mxu0 0
        %1109 = vmatpush1.bf16.msra.mxu0 %v1086
        %1110 = vmatprep.subr.bf16.mxu0 0
        %1111 = vmatpush1.bf16.msra.mxu0 %v1087
        %1112 = vmatprep.subr.bf16.mxu0 0
        %1113 = vmatpush1.bf16.msra.mxu0 0
        %1114 = vmatprep.subr.bf16.mxu0 0
        %1115 = vmatpush1.bf16.msra.mxu0 0
        %1116 = vmatprep.subr.bf16.mxu0 0
        %1117 = vmatpush1.bf16.msra.mxu0 0
        %1118 = vmatprep.subr.bf16.mxu0 0
        %1119 = vmatpush1.bf16.msra.mxu0 0
        %1120 = vmatprep.subr.bf16.mxu0 0
        %1121 = vmatpush1.bf16.msra.mxu0 0
        %1122 = vmatprep.subr.bf16.mxu0 0
        %1123 = vmatpush1.bf16.msra.mxu0 0
        %1124 = vmatprep.subr.bf16.mxu0 0
        %1125 = vmatpush1.bf16.msra.mxu0 0
        %1126 = vmatprep.subr.bf16.mxu0 0
        %1127 = vmatpush1.bf16.msra.mxu0 0
        %1128 = vmatprep.mubr.bf16.mxu0 0
        %1129 = vmatmul.mubr.bf16.gmra.mrb[0].mxu0 %v1023
        %v1130 = vpop.f32.mrb[0].mxu0
        %v1131 = vadd.f32 %v1046, %v1130
        %v1132 = vpop.f32.mrb[0].mxu0
        %v1133 = vpop.f32.mrb[0].mxu0
        %v1134 = vadd.f32 %v1046, %v1133
        %v1135 = vpop.f32.mrb[0].mxu0
        %1136 = vmatprep.mubr.bf16.mxu0 0
        %1137 = vmatmul.mubr.bf16.gmra.mrb[0].mxu0 %v1024
        %v1138 = vpop.f32.mrb[0].mxu0
        %v1139 = vadd.f32 %v1046, %v1138
        %v1140 = vpop.f32.mrb[0].mxu0
        %v1141 = vpop.f32.mrb[0].mxu0
        %v1142 = vadd.f32 %v1046, %v1141
        %v1143 = vpop.f32.mrb[0].mxu0
        %1144 = vdwg.mxu0
        %v1145 = vmax.f32 %v1131, -20.0
        %v1146 = vmax.f32 %v1134, -20.0
        %v1147 = vmax.f32 %v1139, -20.0
        %v1148 = vmax.f32 %v1142, -20.0
        %v1149 = vmin.f32 %v1145, 2.0
        %v1150 = vmin.f32 %v1146, 2.0
        %v1151 = vmin.f32 %v1147, 2.0
        %v1152 = vmin.f32 %v1148, 2.0
        %vm1153 = vcmp.lt.s32.totalorder %v444, 2
        %v1154 = vsel %vm1153, %v1131, %v1149
        %v1155 = vsel %vm1153, %v1134, %v1150
        %v1156 = vsel %vm1153, %v1139, %v1151
        %v1157 = vsel %vm1153, %v1142, %v1152
        %1158 = vst [vmem:[%s424] sm:$0xff] %v1154
        %1159 = vst [vmem:[%s424 + $0x8] sm:$0xff] %v1155
        %1160 = vst [vmem:[%s424 + $0x10] sm:$0xff] %v1156
        %1161 = vst [vmem:[%s424 + $0x18] sm:$0xff] %v1157
        %s1162 = sand.u32 %s271, 1
        %s1163 = scalar_lea.sflag [#allocation4], %s1162
        %s1164 = sand.u32 %s271, 1
        %s1165 = smul.addr %s1164, 32
        %s1166 = scalar_lea.vmem [#allocation8], %s1165
        // Predicated region
        $region77: #{tpu_custom_call.1} parent=63 // pred_check
          %p1167 = pneg %p281
        $region78: #{tpu_custom_call.1} parent=63 // pred_check_branch
          %1169 = sbr.rel (%p1167) target = $region80
        $region79: #{tpu_custom_call.1} parent=63 // pred_region
          %s1170 = smul.u32 4, %s27
          %s1172 = ssub.s32 512, 512
          %1173 = vsyncadd %s1163, %s1172
          %s1174 = smul.addr %s1170, 128
          %s1175 = scalar_lea.hbm %s11, %s1174
          %s1176 = sshll.u32 %s1166, 4
          %s1177 = int_to_ptr.vmem [resolvable:$true] %s1176
          %1182 = dma.vmem_to_hbm [thread:$0]  %s1177, 512, %s1175, %s1163, 128, 128, 8
        $region80: #{tpu_custom_call.1} parent=63 // pred_fallthru
          _
      $region64: #{tpu_custom_call.1} parent=5 // pred_fallthru
        _
      %p1183 = scmp.le.s32.totalorder 2, %s22
      // Predicated region
      $region81: #{tpu_custom_call.1} parent=5 // pred_check
        %p1184 = pneg %p1183
      $region82: #{tpu_custom_call.1} parent=5 // pred_check_branch
        %1186 = sbr.rel (%p1184) target = $region84
      $region83: #{tpu_custom_call.1} parent=5 // pred_region
        %s1187 = ssub.s32 %s22, 2
        // Predicated region
        $region85: #{tpu_custom_call.1} parent=83 // pred_check
          %p1188 = pneg %p287
        $region86: #{tpu_custom_call.1} parent=83 // pred_check_branch
          %1190 = sbr.rel (%p1188) target = $region88
        $region87: #{tpu_custom_call.1} parent=83 // pred_region
          %s1191 = sand.u32 %s272, 1
          %s1192 = scalar_lea.sflag [#allocation4], %s1191
          %s1193 = sand.u32 %s272, 1
          %s1194 = smul.addr %s1193, 32
          %s1195 = scalar_lea.vmem [#allocation8], %s1194
          %1196 = dma.done %s1192, 512
        $region88: #{tpu_custom_call.1} parent=83 // pred_fallthru
          _
      $region84: #{tpu_custom_call.1} parent=5 // pred_fallthru
        _
    $region6: #{tpu_custom_call.1} parent=1 // loop_footer
      %s26 = sadd.s32 1, %s22
    $region7: #{tpu_custom_call.1} parent=1 // loop_footer_branch
      %21 = sbr.rel target = $region3
    $region8: #{tpu_custom_call.1} parent=1 // loop_exit
      _
    %1197 = vsyncpa [#allocation3], 1
    %s1198 = scalar_lea.sflag [#allocation3], 1
    %1199 = vsyncpa %s1198, 1
    %1200 = vsyncpa [#allocation6], 1
    %1201 = vsyncpa [#allocation4], 1
    %s1202 = scalar_lea.sflag [#allocation4], 1
    %1203 = vsyncpa %s1202, 1

</llo_original>
